<compile_context>
chip_gen: v7x
topology: tpu7x:2x2x1
jax: 0.10.0
libtpu: 0.0.40
codegen_flags: <defaults>
</compile_context>

<pallas_src>
import math
import functools

import jax
import jax.numpy as jnp
from jax import lax
from jax.experimental import pallas as pl
from jax.experimental.pallas import tpu as pltpu


def _silu(x):
    return x * jax.nn.sigmoid(x)


def _round_up(x, m):
    return ((x + m - 1) // m) * m


def _equivariant_update_kernel(edge_feat_ref, cd_t_ref, edge_mask_ref, row_ref,
                               coord_t_ref, node_mask_t_ref,
                               w1_ref, b1_ref, w2_ref, b2_ref, w3_ref,
                               out_ref, cnt_ref, *,
                               tanh, coords_range, normalization_factor,
                               aggregation_method, n_pad):
    i = pl.program_id(0)
    last = pl.num_programs(0) - 1

    @pl.when(i == 0)
    def _init():
        out_ref[...] = jnp.zeros_like(out_ref)
        if aggregation_method == 'mean':
            cnt_ref[...] = jnp.zeros_like(cnt_ref)

    # ---- coord_mlp: Linear -> SiLU -> Linear -> SiLU -> Linear(->1, no bias)
    # bf16 MXU operands, f32 accumulation; elementwise stays f32.
    x = edge_feat_ref[...]                                              # [tE, F] bf16
    h1 = _silu(jnp.dot(x, w1_ref[...],
                       preferred_element_type=jnp.float32) + b1_ref[...])
    h2 = _silu(jnp.dot(h1.astype(jnp.bfloat16), w2_ref[...],
                       preferred_element_type=jnp.float32) + b2_ref[...])
    # final 1-wide projection: VPU multiply + lane reduction (keep off the MXU)
    m = jnp.sum(h2 * w3_ref[...], axis=-1, keepdims=True)               # [tE, 1]
    if tanh:
        m = jnp.tanh(m) * coords_range
    m = m * edge_mask_ref[...]                                          # [tE, 1]

    # ---- segment-sum as a lane-dense MXU matmul (nodes on lanes)
    te = row_ref.shape[0]
    node_iota = lax.broadcasted_iota(jnp.int32, (te, n_pad), 1)         # [tE, N]
    onehot = (node_iota == row_ref[...]).astype(jnp.float32)            # [tE, N]
    weighted = onehot * m                                               # [tE, N]
    out_ref[...] += jnp.dot(cd_t_ref[...], weighted,
                            preferred_element_type=jnp.float32)         # [8, N]

    if aggregation_method == 'mean':
        # counts intentionally ignore edge_mask (matches reference); padded
        # edges have row == -1 so they never hit a one-hot column.
        cnt_ref[...] += jnp.sum(onehot, axis=0, keepdims=True)          # [1, N]

    @pl.when(i == last)
    def _finalize():
        agg = out_ref[...]
        if aggregation_method == 'sum':
            agg = agg * (1.0 / normalization_factor)
        elif aggregation_method == 'mean':
            cnt = cnt_ref[...]
            cnt = jnp.where(cnt == 0.0, 1.0, cnt)
            agg = agg / cnt
        out_ref[...] = (coord_t_ref[...] + agg) * node_mask_t_ref[...]


def equivariant_update(h, coord, edge_index, coord_diff, edge_attr, params, *,
                       tanh=False, coords_range=10.0,
                       normalization_factor=100.0,
                       aggregation_method='sum',
                       node_mask=None, edge_mask=None,
                       tile_e=256):
    """JAX wrapper reproducing EquivariantUpdate.forward."""
    row, col = edge_index
    n = coord.shape[0]
    e = row.shape[0]
    w1, b1, w2, b2, w3 = params
    f = w1.shape[0]
    hidden = w1.shape[1]

    # Glue: gather endpoint features + edge attrs (irregular gather stays in XLA).
    edge_feat = jnp.concatenate(
        [jnp.take(h, row, axis=0), jnp.take(h, col, axis=0),
         edge_attr.astype(h.dtype)], axis=1).astype(jnp.float32)        # [E, F]

    if edge_mask is None:
        edge_mask = jnp.ones((e, 1), jnp.float32)
    if node_mask is None:
        node_mask = jnp.ones((n, 1), jnp.float32)

    # ---- padded / transposed layouts
    tile_e = min(tile_e, _round_up(e, 128))   # tE multiple of 128 (lane blocks)
    e_pad = _round_up(e, tile_e)
    n_pad = _round_up(n, 128)                 # nodes on lanes -> lane-dense out
    f_pad = _round_up(f, 128)                 # full-width MXU contraction tiles

    edge_feat_p = (jnp.zeros((e_pad, f_pad), jnp.float32)
                   .at[:e, :f].set(edge_feat)).astype(jnp.bfloat16)
    cd_t = (jnp.zeros((8, e_pad), jnp.float32)
            .at[:3, :e].set(coord_diff.T.astype(jnp.float32)))
    em_p = (jnp.zeros((e_pad, 1), jnp.float32)
            .at[:e].set(edge_mask.astype(jnp.float32).reshape(e, 1)))
    row_p = (jnp.full((e_pad, 1), -1, jnp.int32)
             .at[:e, 0].set(row.astype(jnp.int32)))
    coord_t = (jnp.zeros((8, n_pad), jnp.float32)
               .at[:3, :n].set(coord.T.astype(jnp.float32)))
    nm_t = (jnp.zeros((1, n_pad), jnp.float32)
            .at[0, :n].set(node_mask.astype(jnp.float32).reshape(n)))

    w1_p = (jnp.zeros((f_pad, hidden), jnp.float32)
            .at[:f].set(w1.astype(jnp.float32))).astype(jnp.bfloat16)
    w2_b = w2.astype(jnp.bfloat16)
    b1_r = b1.reshape(1, hidden).astype(jnp.float32)
    b2_r = b2.reshape(1, hidden).astype(jnp.float32)
    w3_r = w3.reshape(1, hidden).astype(jnp.float32)

    num_tiles = e_pad // tile_e

    kernel = functools.partial(
        _equivariant_update_kernel,
        tanh=tanh, coords_range=coords_range,
        normalization_factor=normalization_factor,
        aggregation_method=aggregation_method,
        n_pad=n_pad)

    # ---- VMEM budget (double-buffered edge tiles + resident params/accumulator)
    tile_bytes = 2 * (tile_e * f_pad * 2 + 8 * tile_e * 4 + 2 * tile_e * 4)
    resident = (f_pad * hidden * 2 + hidden * hidden * 2 + 3 * hidden * 4
                + 2 * 8 * n_pad * 4 + 2 * n_pad * 4)
    transient = 2 * tile_e * n_pad * 4 + 4 * tile_e * hidden * 4
    vmem_limit = int(min(max(2 * (tile_bytes + resident + transient), 8 << 20),
                         64 << 20))

    cost = pl.CostEstimate(
        flops=int(2 * e_pad * (f_pad * hidden + hidden * hidden + hidden + 8 * n_pad)),
        transcendentals=int(2 * e_pad * hidden + (e_pad if tanh else 0)),
        bytes_accessed=int(edge_feat_p.size * 2 + cd_t.size * 4
                           + e_pad * 8 + 3 * 8 * n_pad * 4))

    grid_spec = pltpu.PrefetchScalarGridSpec(
        num_scalar_prefetch=0,
        grid=(num_tiles,),
        in_specs=[
            pl.BlockSpec((tile_e, f_pad), lambda i: (i, 0)),   # edge_feat
            pl.BlockSpec((8, tile_e), lambda i: (0, i)),       # coord_diff^T
            pl.BlockSpec((tile_e, 1), lambda i: (i, 0)),       # edge_mask
            pl.BlockSpec((tile_e, 1), lambda i: (i, 0)),       # row ids
            pl.BlockSpec((8, n_pad), lambda i: (0, 0)),        # coord^T (resident)
            pl.BlockSpec((1, n_pad), lambda i: (0, 0)),        # node_mask^T
            pl.BlockSpec((f_pad, hidden), lambda i: (0, 0)),   # w1 (resident)
            pl.BlockSpec((1, hidden), lambda i: (0, 0)),       # b1
            pl.BlockSpec((hidden, hidden), lambda i: (0, 0)),  # w2
            pl.BlockSpec((1, hidden), lambda i: (0, 0)),       # b2
            pl.BlockSpec((1, hidden), lambda i: (0, 0)),       # w3
        ],
        out_specs=pl.BlockSpec((8, n_pad), lambda i: (0, 0)),  # agg/out accumulator
        scratch_shapes=[pltpu.VMEM((1, n_pad), jnp.float32)],  # counts ('mean')
    )

    out_t = pl.pallas_call(
        kernel,
        out_shape=jax.ShapeDtypeStruct((8, n_pad), jnp.float32),
        grid_spec=grid_spec,
        compiler_params=pltpu.CompilerParams(
            dimension_semantics=("arbitrary",),
            vmem_limit_bytes=vmem_limit),
        cost_estimate=cost,
    )(edge_feat_p, cd_t, em_p, row_p, coord_t, nm_t,
      w1_p, b1_r, w2_b, b2_r, w3_r)

    # TODO(synk): on v7x a 2-TensorCore split of the edge range (partial agg per
    # core, summed in the wrapper) would roughly double MXU throughput.
    return out_t[:3, :n].T                                              # [N, 3]


def init_params(key, hidden_nf, edges_in_d=1):
    """Deterministic parameter init matching the torch module's shapes.

    coord_mlp = Linear(2H+D -> H) ; SiLU ; Linear(H -> H) ; SiLU ;
                Linear(H -> 1, bias=False, xavier_uniform gain=0.001)
    Weights are stored already transposed ([in, out]) so forward is x @ W + b.
    """
    input_edge = hidden_nf * 2 + edges_in_d
    k1, k2, k3, k4, k5 = jax.random.split(key, 5)

    def kaiming_uniform(k, fan_in, shape):
        bound = math.sqrt(1.0 / fan_in)
        return jax.random.uniform(k, shape, jnp.float32, -bound, bound)

    w1 = kaiming_uniform(k1, input_edge, (input_edge, hidden_nf))
    b1 = kaiming_uniform(k2, input_edge, (hidden_nf,))
    w2 = kaiming_uniform(k3, hidden_nf, (hidden_nf, hidden_nf))
    b2 = kaiming_uniform(k4, hidden_nf, (hidden_nf,))
    xavier_bound = 0.001 * math.sqrt(6.0 / (hidden_nf + 1))
    w3 = jax.random.uniform(k5, (hidden_nf, 1), jnp.float32,
                            -xavier_bound, xavier_bound)
    return (w1, b1, w2, b2, w3)


def _reference(h, coord, edge_index, coord_diff, edge_attr, params, *,
               tanh, coords_range, normalization_factor, aggregation_method,
               node_mask, edge_mask):
    """Pure-JAX f32 reference mirroring the PyTorch forward."""
    row, col = edge_index
    w1, b1, w2, b2, w3 = params
    x = jnp.concatenate([h[row], h[col], edge_attr], axis=1)
    y = _silu(x @ w1 + b1)
    y = _silu(y @ w2 + b2)
    m = y @ w3
    if tanh:
        m = jnp.tanh(m) * coords_range
    trans = coord_diff * m
    if edge_mask is not None:
        trans = trans * edge_mask
    agg = jnp.zeros((coord.shape[0], 3), jnp.float32).at[row].add(trans)
    if aggregation_method == 'sum':
        agg = agg / normalization_factor
    elif aggregation_method == 'mean':
        norm = jnp.zeros((coord.shape[0], 3), jnp.float32).at[row].add(
            jnp.ones_like(trans))
        norm = jnp.where(norm == 0, 1.0, norm)
        agg = agg / norm
    out = coord + agg
    if node_mask is not None:
        out = out * node_mask
    return out


if __name__ == "__main__":
    key = jax.random.PRNGKey(0)

    N = 8
    hidden_nf = 32
    edges_in_d = 1
    tanh = False
    coords_range = 10.0
    normalization_factor = 100.0
    aggregation_method = 'sum'

    # Fully-connected edge index (no self loops).
    rows, cols = [], []
    for i in range(N):
        for j in range(N):
            if i != j:
                rows.append(i)
                cols.append(j)
    row = jnp.array(rows, dtype=jnp.int32)
    col = jnp.array(cols, dtype=jnp.int32)
    E = row.shape[0]

    k_h, k_c, k_cd, k_ea, k_nm, k_em, k_p = jax.random.split(key, 7)
    h = jax.random.normal(k_h, (N, hidden_nf), jnp.float32)
    coord = jax.random.normal(k_c, (N, 3), jnp.float32)
    coord_diff = coord[row] - coord[col]
    edge_attr = jax.random.normal(k_ea, (E, edges_in_d), jnp.float32)
    node_mask = (jax.random.uniform(k_nm, (N, 1)) > 0.2).astype(jnp.float32)
    edge_mask = (jax.random.uniform(k_em, (E, 1)) > 0.2).astype(jnp.float32)

    params = init_params(k_p, hidden_nf, edges_in_d)

    out = equivariant_update(
        h, coord, (row, col), coord_diff, edge_attr, params,
        tanh=tanh, coords_range=coords_range,
        normalization_factor=normalization_factor,
        aggregation_method=aggregation_method,
        node_mask=node_mask, edge_mask=edge_mask)
    out = jax.block_until_ready(out)

    ref = _reference(
        h, coord, (row, col), coord_diff, edge_attr, params,
        tanh=tanh, coords_range=coords_range,
        normalization_factor=normalization_factor,
        aggregation_method=aggregation_method,
        node_mask=node_mask, edge_mask=edge_mask)

    assert out.shape == (N, 3)
    # bf16 MXU operands (f32 accumulation) -> loosened tolerance vs f32 reference.
    assert jnp.allclose(out, ref, atol=1e-3, rtol=1e-3), (
        f"max abs err {jnp.max(jnp.abs(out - ref))}")
    print("KERNEL_OK")
</pallas_src>

<mosaic_0001>
module attributes {stable_mosaic.version = 11 : i64} {
  func.func @_equivariant_update_kernel(%arg0: i32, %arg1: memref<128x128xbf16, #tpu.memory_space<vmem>>, %arg2: memref<8x128xf32, #tpu.memory_space<vmem>>, %arg3: memref<128x1xf32, #tpu.memory_space<vmem>>, %arg4: memref<128x1xi32, #tpu.memory_space<vmem>>, %arg5: memref<8x128xf32, #tpu.memory_space<vmem>>, %arg6: memref<1x128xf32, #tpu.memory_space<vmem>>, %arg7: memref<128x32xbf16, #tpu.memory_space<vmem>>, %arg8: memref<1x32xf32, #tpu.memory_space<vmem>>, %arg9: memref<32x32xbf16, #tpu.memory_space<vmem>>, %arg10: memref<1x32xf32, #tpu.memory_space<vmem>>, %arg11: memref<1x32xf32, #tpu.memory_space<vmem>>, %arg12: memref<8x128xf32, #tpu.memory_space<vmem>>, %arg13: memref<1x128xf32, #tpu.memory_space<vmem>>) attributes {dimension_semantics = [#tpu.dimension_semantics<arbitrary>], iteration_bounds = array<i64: 1>, scalar_prefetch = 0 : i64, scratch_operands = 1 : i64, tpu.core_type = #tpu.core_type<tc>, window_params = [{transform_indices = @transform_0, window_bounds = array<i64: 128, 128>}, {transform_indices = @transform_1, window_bounds = array<i64: 8, 128>}, {transform_indices = @transform_2, window_bounds = array<i64: 128, 1>}, {transform_indices = @transform_3, window_bounds = array<i64: 128, 1>}, {pipeline_mode = #tpu.pipeline_mode<synchronous>, transform_indices = @transform_4, window_bounds = array<i64: 8, 128>}, {pipeline_mode = #tpu.pipeline_mode<synchronous>, transform_indices = @transform_5, window_bounds = array<i64: 1, 128>}, {pipeline_mode = #tpu.pipeline_mode<synchronous>, transform_indices = @transform_6, window_bounds = array<i64: 128, 32>}, {pipeline_mode = #tpu.pipeline_mode<synchronous>, transform_indices = @transform_7, window_bounds = array<i64: 1, 32>}, {pipeline_mode = #tpu.pipeline_mode<synchronous>, transform_indices = @transform_8, window_bounds = array<i64: 32, 32>}, {pipeline_mode = #tpu.pipeline_mode<synchronous>, transform_indices = @transform_9, window_bounds = array<i64: 1, 32>}, {pipeline_mode = #tpu.pipeline_mode<synchronous>, transform_indices = @transform_10, window_bounds = array<i64: 1, 32>}, {pipeline_mode = #tpu.pipeline_mode<synchronous>, transform_indices = @transform_11, window_bounds = array<i64: 8, 128>}]} {
    %c0_i32 = arith.constant 0 : i32
    %0 = arith.cmpi eq, %arg0, %c0_i32 : i32
    %1 = arith.extui %0 : i1 to i32
    %c0_i32_0 = arith.constant 0 : i32
    %2 = arith.cmpi ne, %1, %c0_i32_0 : i32
    scf.if %2 {
      %cst_29 = arith.constant 0.000000e+00 : f32
      %50 = vector.broadcast %cst_29 : f32 to vector<8x128xf32>
      %c0_30 = arith.constant 0 : index
      %c0_31 = arith.constant 0 : index
      %51 = vector.load %arg12[%c0_30, %c0_31] : memref<8x128xf32, #tpu.memory_space<vmem>>, vector<8x128xf32>
      tpu.vector_store %arg12[%c0_30, %c0_31], %50 {strides = array<i32>} : memref<8x128xf32, #tpu.memory_space<vmem>>, vector<8x128xf32>,
    } else {
    }
    %c0 = arith.constant 0 : index
    %c0_1 = arith.constant 0 : index
    %3 = vector.load %arg1[%c0, %c0_1] : memref<128x128xbf16, #tpu.memory_space<vmem>>, vector<128x128xbf16>
    %c0_2 = arith.constant 0 : index
    %c0_3 = arith.constant 0 : index
    %4 = vector.load %arg7[%c0_2, %c0_3] : memref<128x32xbf16, #tpu.memory_space<vmem>>, vector<128x32xbf16>
    %cst = arith.constant dense<0.000000e+00> : vector<128x32xf32>
    %5 = tpu.matmul %3, %4, %cst {dimension_numbers = #tpu.dot_dimension_numbers<[1], [0], [0], [1], [0, 0, 1, 1], [], []>} : vector<128x128xbf16>, vector<128x32xbf16>, vector<128x32xf32> -> vector<128x32xf32>
    %c0_4 = arith.constant 0 : index
    %c0_5 = arith.constant 0 : index
    %6 = vector.load %arg8[%c0_4, %c0_5] : memref<1x32xf32, #tpu.memory_space<vmem>>, vector<1x32xf32>
    %7 = vector.broadcast %6 : vector<1x32xf32> to vector<128x32xf32>
    %8 = arith.addf %5, %7 : vector<128x32xf32>
    %9 = arith.negf %8 : vector<128x32xf32>
    %10 = math.exp %9 : vector<128x32xf32>
    %cst_6 = arith.constant 1.000000e+00 : f32
    %11 = vector.broadcast %cst_6 : f32 to vector<128x32xf32>
    %12 = arith.addf %11, %10 : vector<128x32xf32>
    %13 = arith.divf %11, %12 : vector<128x32xf32>
    %14 = arith.mulf %8, %13 : vector<128x32xf32>
    %15 = arith.truncf %14 : vector<128x32xf32> to vector<128x32xbf16>
    %c0_7 = arith.constant 0 : index
    %c0_8 = arith.constant 0 : index
    %16 = vector.load %arg9[%c0_7, %c0_8] : memref<32x32xbf16, #tpu.memory_space<vmem>>, vector<32x32xbf16>
    %cst_9 = arith.constant dense<0.000000e+00> : vector<128x32xf32>
    %17 = tpu.matmul %15, %16, %cst_9 {dimension_numbers = #tpu.dot_dimension_numbers<[1], [0], [0], [1], [0, 0, 1, 1], [], []>} : vector<128x32xbf16>, vector<32x32xbf16>, vector<128x32xf32> -> vector<128x32xf32>
    %c0_10 = arith.constant 0 : index
    %c0_11 = arith.constant 0 : index
    %18 = vector.load %arg10[%c0_10, %c0_11] : memref<1x32xf32, #tpu.memory_space<vmem>>, vector<1x32xf32>
    %19 = vector.broadcast %18 : vector<1x32xf32> to vector<128x32xf32>
    %20 = arith.addf %17, %19 : vector<128x32xf32>
    %21 = arith.negf %20 : vector<128x32xf32>
    %22 = math.exp %21 : vector<128x32xf32>
    %cst_12 = arith.constant 1.000000e+00 : f32
    %23 = vector.broadcast %cst_12 : f32 to vector<128x32xf32>
    %24 = arith.addf %23, %22 : vector<128x32xf32>
    %25 = arith.divf %23, %24 : vector<128x32xf32>
    %26 = arith.mulf %20, %25 : vector<128x32xf32>
    %c0_13 = arith.constant 0 : index
    %c0_14 = arith.constant 0 : index
    %27 = vector.load %arg11[%c0_13, %c0_14] : memref<1x32xf32, #tpu.memory_space<vmem>>, vector<1x32xf32>
    %28 = vector.broadcast %27 : vector<1x32xf32> to vector<128x32xf32>
    %29 = arith.mulf %26, %28 : vector<128x32xf32>
    %cst_15 = arith.constant dense<0.000000e+00> : vector<128xf32>
    %30 = vector.multi_reduction <add>, %29, %cst_15 [1] : vector<128x32xf32> to vector<128xf32>
    %31 = vector.shape_cast %30 : vector<128xf32> to vector<128x1xf32>
    %c0_16 = arith.constant 0 : index
    %c0_17 = arith.constant 0 : index
    %32 = vector.load %arg3[%c0_16, %c0_17] : memref<128x1xf32, #tpu.memory_space<vmem>>, vector<128x1xf32>
    %33 = arith.mulf %31, %32 : vector<128x1xf32>
    %34 = tpu.iota {dimensions = array<i32: 1>} : vector<128x128xi32>
    %c0_18 = arith.constant 0 : index
    %c0_19 = arith.constant 0 : index
    %35 = vector.load %arg4[%c0_18, %c0_19] : memref<128x1xi32, #tpu.memory_space<vmem>>, vector<128x1xi32>
    %36 = vector.broadcast %35 : vector<128x1xi32> to vector<128x128xi32>
    %37 = arith.cmpi eq, %34, %36 : vector<128x128xi32>
    %38 = arith.extui %37 : vector<128x128xi1> to vector<128x128xi32>
    %39 = arith.sitofp %38 : vector<128x128xi32> to vector<128x128xf32>
    %40 = vector.broadcast %33 : vector<128x1xf32> to vector<128x128xf32>
    %41 = arith.mulf %39, %40 : vector<128x128xf32>
    %c0_20 = arith.constant 0 : index
    %c0_21 = arith.constant 0 : index
    %42 = vector.load %arg12[%c0_20, %c0_21] : memref<8x128xf32, #tpu.memory_space<vmem>>, vector<8x128xf32>
    %c0_22 = arith.constant 0 : index
    %c0_23 = arith.constant 0 : index
    %43 = vector.load %arg2[%c0_22, %c0_23] : memref<8x128xf32, #tpu.memory_space<vmem>>, vector<8x128xf32>
    %cst_24 = arith.constant dense<0.000000e+00> : vector<8x128xf32>
    %44 = tpu.matmul %43, %41, %cst_24 {dimension_numbers = #tpu.dot_dimension_numbers<[1], [0], [0], [1], [0, 0, 1, 1], [], []>} : vector<8x128xf32>, vector<128x128xf32>, vector<8x128xf32> -> vector<8x128xf32>
    %45 = arith.addf %42, %44 : vector<8x128xf32>
    %c0_25 = arith.constant 0 : index
    %c0_26 = arith.constant 0 : index
    %46 = vector.load %arg12[%c0_25, %c0_26] : memref<8x128xf32, #tpu.memory_space<vmem>>, vector<8x128xf32>
    tpu.vector_store %arg12[%c0_25, %c0_26], %45 {strides = array<i32>} : memref<8x128xf32, #tpu.memory_space<vmem>>, vector<8x128xf32>,
    %c0_i32_27 = arith.constant 0 : i32
    %47 = arith.cmpi eq, %arg0, %c0_i32_27 : i32
    %48 = arith.extui %47 : i1 to i32
    %c0_i32_28 = arith.constant 0 : i32
    %49 = arith.cmpi ne, %48, %c0_i32_28 : i32
    scf.if %49 {
      %c0_29 = arith.constant 0 : index
      %c0_30 = arith.constant 0 : index
      %50 = vector.load %arg12[%c0_29, %c0_30] : memref<8x128xf32, #tpu.memory_space<vmem>>, vector<8x128xf32>
      %cst_31 = arith.constant 0.00999999977 : f32
      %51 = vector.broadcast %cst_31 : f32 to vector<8x128xf32>
      %52 = arith.mulf %50, %51 : vector<8x128xf32>
      %c0_32 = arith.constant 0 : index
      %c0_33 = arith.constant 0 : index
      %53 = vector.load %arg5[%c0_32, %c0_33] : memref<8x128xf32, #tpu.memory_space<vmem>>, vector<8x128xf32>
      %54 = arith.addf %53, %52 : vector<8x128xf32>
      %c0_34 = arith.constant 0 : index
      %c0_35 = arith.constant 0 : index
      %55 = vector.load %arg6[%c0_34, %c0_35] : memref<1x128xf32, #tpu.memory_space<vmem>>, vector<1x128xf32>
      %56 = vector.broadcast %55 : vector<1x128xf32> to vector<8x128xf32>
      %57 = arith.mulf %54, %56 : vector<8x128xf32>
      %c0_36 = arith.constant 0 : index
      %c0_37 = arith.constant 0 : index
      %58 = vector.load %arg12[%c0_36, %c0_37] : memref<8x128xf32, #tpu.memory_space<vmem>>, vector<8x128xf32>
      tpu.vector_store %arg12[%c0_36, %c0_37], %57 {strides = array<i32>} : memref<8x128xf32, #tpu.memory_space<vmem>>, vector<8x128xf32>,
    } else {
    }
    return
  }
  func.func @transform_0(%arg0: i32) -> (i32, i32) {
    %c0_i32 = arith.constant 0 : i32
    %c0_i32_0 = arith.constant 0 : i32
    return %arg0, %c0_i32 : i32, i32
  }
  func.func @transform_1(%arg0: i32) -> (i32, i32) {
    %c0_i32 = arith.constant 0 : i32
    %c0_i32_0 = arith.constant 0 : i32
    return %c0_i32, %arg0 : i32, i32
  }
  func.func @transform_2(%arg0: i32) -> (i32, i32) {
    %c0_i32 = arith.constant 0 : i32
    %c0_i32_0 = arith.constant 0 : i32
    return %arg0, %c0_i32 : i32, i32
  }
  func.func @transform_3(%arg0: i32) -> (i32, i32) {
    %c0_i32 = arith.constant 0 : i32
    %c0_i32_0 = arith.constant 0 : i32
    return %arg0, %c0_i32 : i32, i32
  }
  func.func @transform_4(%arg0: i32) -> (i32, i32) {
    %c0_i32 = arith.constant 0 : i32
    %c0_i32_0 = arith.constant 0 : i32
    %c0_i32_1 = arith.constant 0 : i32
    return %c0_i32, %c0_i32_0 : i32, i32
  }
  func.func @transform_5(%arg0: i32) -> (i32, i32) {
    %c0_i32 = arith.constant 0 : i32
    %c0_i32_0 = arith.constant 0 : i32
    %c0_i32_1 = arith.constant 0 : i32
    return %c0_i32, %c0_i32_0 : i32, i32
  }
  func.func @transform_6(%arg0: i32) -> (i32, i32) {
    %c0_i32 = arith.constant 0 : i32
    %c0_i32_0 = arith.constant 0 : i32
    %c0_i32_1 = arith.constant 0 : i32
    return %c0_i32, %c0_i32_0 : i32, i32
  }
  func.func @transform_7(%arg0: i32) -> (i32, i32) {
    %c0_i32 = arith.constant 0 : i32
    %c0_i32_0 = arith.constant 0 : i32
    %c0_i32_1 = arith.constant 0 : i32
    return %c0_i32, %c0_i32_0 : i32, i32
  }
  func.func @transform_8(%arg0: i32) -> (i32, i32) {
    %c0_i32 = arith.constant 0 : i32
    %c0_i32_0 = arith.constant 0 : i32
    %c0_i32_1 = arith.constant 0 : i32
    return %c0_i32, %c0_i32_0 : i32, i32
  }
  func.func @transform_9(%arg0: i32) -> (i32, i32) {
    %c0_i32 = arith.constant 0 : i32
    %c0_i32_0 = arith.constant 0 : i32
    %c0_i32_1 = arith.constant 0 : i32
    return %c0_i32, %c0_i32_0 : i32, i32
  }
  func.func @transform_10(%arg0: i32) -> (i32, i32) {
    %c0_i32 = arith.constant 0 : i32
    %c0_i32_0 = arith.constant 0 : i32
    %c0_i32_1 = arith.constant 0 : i32
    return %c0_i32, %c0_i32_0 : i32, i32
  }
  func.func @transform_11(%arg0: i32) -> (i32, i32) {
    %c0_i32 = arith.constant 0 : i32
    %c0_i32_0 = arith.constant 0 : i32
    %c0_i32_1 = arith.constant 0 : i32
    return %c0_i32, %c0_i32_0 : i32, i32
  }
}

</mosaic_0001>

<llo_original>
// kernel: tpu_custom_call.1
$region0: #{tpu_custom_call.1}
  #allocation0 [shape = 'u32[]', space=smem, size = 0x4, offset = 0x4, fixed_abs, tag = 'smem constant byte address 0x4 - core index']
  #allocation1 [shape = 'u32[144,128]{1,0:T(1,128)}', space=vmem, size = 0x12000, scoped, tag = 'internal scratch']
  #allocation2 [shape = 'f32[1,128]{1,0:T(1,128)}', space=vmem, size = 0x200, scoped, tag = 'scratch operand']
  %s0 = inlined_call_operand.vmem [shape: bf16[128,128], index: 0, kind: input, shape index: {}]
  %s1 = inlined_call_operand.vmem [shape: f32[8,128], index: 1, kind: input, shape index: {}]
  %s2 = inlined_call_operand.vmem [shape: f32[128,1], index: 2, kind: input, shape index: {}]
  %s3 = inlined_call_operand.vmem [shape: s32[128,1], index: 3, kind: input, shape index: {}]
  %s4 = inlined_call_operand.vmem [shape: f32[8,128], index: 4, kind: input, shape index: {}]
  %s5 = inlined_call_operand.vmem [shape: f32[1,128], index: 5, kind: input, shape index: {}]
  %s6 = inlined_call_operand.vmem [shape: bf16[128,32], index: 6, kind: input, shape index: {}]
  %s7 = inlined_call_operand.vmem [shape: f32[1,32], index: 7, kind: input, shape index: {}]
  %s8 = inlined_call_operand.vmem [shape: bf16[32,32], index: 8, kind: input, shape index: {}]
  %s9 = inlined_call_operand.vmem [shape: f32[1,32], index: 9, kind: input, shape index: {}]
  %s10 = inlined_call_operand.vmem [shape: f32[1,32], index: 10, kind: input, shape index: {}]
  %s11 = inlined_call_operand.hbm [shape: f32[8,128], index: 11, kind: output, shape index: {}]
  %s12 = sld [smem:[#allocation0]]
  $region62: #{tpu_custom_call.1} parent=0
    _
  %s14 = ssub.s32 1, %s12
  %s15 = scalar_select 0, %s14, %s12
  $region1: #{tpu_custom_call.1} parent=0
    #allocation3 [shape = 'u8[4096]{0}', space=vmem, size = 0x1000, scoped, tag = 'output window, operand 0, single buffered']
    #allocation4 [shape = 's32[1]{0}', space=sflag, size = 0x4, scoped, tag = 'scoped memory for tpu_custom_call.1']
    %16 = vsyncpa [#allocation4], 0
    // Predicated region
    $region2: #{tpu_custom_call.1} parent=1 // pred_check
      _
    $region3: #{tpu_custom_call.1} parent=1 // pred_check_branch
      %18 = sbr.rel (0) target = $region5
    $region4: #{tpu_custom_call.1} parent=1 // pred_region
      _
    $region5: #{tpu_custom_call.1} parent=1 // pred_fallthru
      _
    // Predicated region
    $region6: #{tpu_custom_call.1} parent=1 // pred_check
      _
    $region7: #{tpu_custom_call.1} parent=1 // pred_check_branch
      %20 = sbr.rel (0) target = $region9
    $region8: #{tpu_custom_call.1} parent=1 // pred_region
      _
    $region9: #{tpu_custom_call.1} parent=1 // pred_fallthru
      _
    // Predicated region
    $region10: #{tpu_custom_call.1} parent=1 // pred_check
      _
    $region11: #{tpu_custom_call.1} parent=1 // pred_check_branch
      %22 = sbr.rel (0) target = $region13
    $region12: #{tpu_custom_call.1} parent=1 // pred_region
      _
    $region13: #{tpu_custom_call.1} parent=1 // pred_fallthru
      _
    // Predicated region
    $region14: #{tpu_custom_call.1} parent=1 // pred_check
      _
    $region15: #{tpu_custom_call.1} parent=1 // pred_check_branch
      %24 = sbr.rel (0) target = $region17
    $region16: #{tpu_custom_call.1} parent=1 // pred_region
      _
    $region17: #{tpu_custom_call.1} parent=1 // pred_fallthru
      _
    // Predicated region
    $region18: #{tpu_custom_call.1} parent=1 // pred_check
      _
    $region19: #{tpu_custom_call.1} parent=1 // pred_check_branch
      %26 = sbr.rel (0) target = $region21
    $region20: #{tpu_custom_call.1} parent=1 // pred_region
      _
    $region21: #{tpu_custom_call.1} parent=1 // pred_fallthru
      _
    // Predicated region
    $region22: #{tpu_custom_call.1} parent=1 // pred_check
      _
    $region23: #{tpu_custom_call.1} parent=1 // pred_check_branch
      %28 = sbr.rel (0) target = $region25
    $region24: #{tpu_custom_call.1} parent=1 // pred_region
      _
    $region25: #{tpu_custom_call.1} parent=1 // pred_fallthru
      _
    // Predicated region
    $region26: #{tpu_custom_call.1} parent=1 // pred_check
      _
    $region27: #{tpu_custom_call.1} parent=1 // pred_check_branch
      %30 = sbr.rel (0) target = $region29
    $region28: #{tpu_custom_call.1} parent=1 // pred_region
      _
    $region29: #{tpu_custom_call.1} parent=1 // pred_fallthru
      _
    // Predicated region
    $region30: #{tpu_custom_call.1} parent=1 // pred_check
      _
    $region31: #{tpu_custom_call.1} parent=1 // pred_check_branch
      %32 = sbr.rel (0) target = $region33
    $region32: #{tpu_custom_call.1} parent=1 // pred_region
      _
    $region33: #{tpu_custom_call.1} parent=1 // pred_fallthru
      _
    // Predicated region
    $region34: #{tpu_custom_call.1} parent=1 // pred_check
      _
    $region35: #{tpu_custom_call.1} parent=1 // pred_check_branch
      %34 = sbr.rel (0) target = $region37
    $region36: #{tpu_custom_call.1} parent=1 // pred_region
      _
    $region37: #{tpu_custom_call.1} parent=1 // pred_fallthru
      _
    // Predicated region
    $region38: #{tpu_custom_call.1} parent=1 // pred_check
      _
    $region39: #{tpu_custom_call.1} parent=1 // pred_check_branch
      %36 = sbr.rel (0) target = $region41
    $region40: #{tpu_custom_call.1} parent=1 // pred_region
      _
    $region41: #{tpu_custom_call.1} parent=1 // pred_fallthru
      _
    // Predicated region
    $region42: #{tpu_custom_call.1} parent=1 // pred_check
      _
    $region43: #{tpu_custom_call.1} parent=1 // pred_check_branch
      %38 = sbr.rel (0) target = $region45
    $region44: #{tpu_custom_call.1} parent=1 // pred_region
      _
    $region45: #{tpu_custom_call.1} parent=1 // pred_fallthru
      _
    %p40 = scmp.eq.s32.totalorder 0, 0
    // Predicated region
    $region46: #{tpu_custom_call.1} parent=1 // pred_check
      %p41 = pneg %p40
    $region47: #{tpu_custom_call.1} parent=1 // pred_check_branch
      %43 = sbr.rel (%p41) target = $region49
    $region48: #{tpu_custom_call.1} parent=1 // pred_region
      %44 = vst [vmem:[#allocation3] sm:$0xff] 0.0
    $region49: #{tpu_custom_call.1} parent=1 // pred_fallthru
      _
    %v45 = vld [vmem:[%s0] sm:$0xf]
    %v46 = vld [vmem:[%s0 + $0x4] sm:$0xf]
    %v47 = vld [vmem:[%s0 + $0x8] sm:$0xf]
    %v48 = vld [vmem:[%s0 + $0xc] sm:$0xf]
    %v49 = vld [vmem:[%s0 + $0x10] sm:$0xf]
    %v50 = vld [vmem:[%s0 + $0x14] sm:$0xf]
    %v51 = vld [vmem:[%s0 + $0x18] sm:$0xf]
    %v52 = vld [vmem:[%s0 + $0x1c] sm:$0xf]
    %v53 = vld [vmem:[%s0 + $0x20] sm:$0xf]
    %v54 = vld [vmem:[%s0 + $0x24] sm:$0xf]
    %v55 = vld [vmem:[%s0 + $0x28] sm:$0xf]
    %v56 = vld [vmem:[%s0 + $0x2c] sm:$0xf]
    %v57 = vld [vmem:[%s0 + $0x30] sm:$0xf]
    %v58 = vld [vmem:[%s0 + $0x34] sm:$0xf]
    %v59 = vld [vmem:[%s0 + $0x38] sm:$0xf]
    %v60 = vld [vmem:[%s0 + $0x3c] sm:$0xf]
    %v61 = vld [vmem:[%s6] sm:$0xf]
    %v62 = vld [vmem:[%s6 + $0x4] sm:$0xf]
    %v63 = vld [vmem:[%s6 + $0x8] sm:$0xf]
    %v64 = vld [vmem:[%s6 + $0xc] sm:$0xf]
    %v65 = vld [vmem:[%s6 + $0x10] sm:$0xf]
    %v66 = vld [vmem:[%s6 + $0x14] sm:$0xf]
    %v67 = vld [vmem:[%s6 + $0x18] sm:$0xf]
    %v68 = vld [vmem:[%s6 + $0x1c] sm:$0xf]
    %v69 = vld [vmem:[%s6 + $0x20] sm:$0xf]
    %v70 = vld [vmem:[%s6 + $0x24] sm:$0xf]
    %v71 = vld [vmem:[%s6 + $0x28] sm:$0xf]
    %v72 = vld [vmem:[%s6 + $0x2c] sm:$0xf]
    %v73 = vld [vmem:[%s6 + $0x30] sm:$0xf]
    %v74 = vld [vmem:[%s6 + $0x34] sm:$0xf]
    %v75 = vld [vmem:[%s6 + $0x38] sm:$0xf]
    %v76 = vld [vmem:[%s6 + $0x3c] sm:$0xf]
    %v77 = vld [vmem:[%s7] sm:$0x1]
    %v79 = vlaneseq
    %v80 = vshrl.u32 %v79, 7
    %v81 = vsub.s32 0, %v80
    %v82 = vrot.slane %v77, %v81
    %v100 = vunpack.c.l.b16 %v45
    %v101 = vunpack.c.l.b16 %v46
    %v102 = vunpack.c.l.b16 %v47
    %v103 = vunpack.c.l.b16 %v48
    %v104 = vunpack.c.l.b16 %v49
    %v105 = vunpack.c.l.b16 %v50
    %v106 = vunpack.c.l.b16 %v51
    %v107 = vunpack.c.l.b16 %v52
    %v108 = vunpack.c.l.b16 %v53
    %v109 = vunpack.c.l.b16 %v54
    %v110 = vunpack.c.l.b16 %v55
    %v111 = vunpack.c.l.b16 %v56
    %v112 = vunpack.c.l.b16 %v57
    %v113 = vunpack.c.l.b16 %v58
    %v114 = vunpack.c.l.b16 %v59
    %v115 = vunpack.c.l.b16 %v60
    %v116 = vpack.c.b16 %v101, %v100
    %v117 = vpack.c.b16 %v103, %v102
    %v118 = vpack.c.b16 %v105, %v104
    %v119 = vpack.c.b16 %v107, %v106
    %v120 = vpack.c.b16 %v109, %v108
    %v121 = vpack.c.b16 %v111, %v110
    %v122 = vpack.c.b16 %v113, %v112
    %v123 = vpack.c.b16 %v115, %v114
    %v148 = vunpack.c.l.b16 %v61
    %v149 = vunpack.c.l.b16 %v62
    %v150 = vunpack.c.l.b16 %v63
    %v151 = vunpack.c.l.b16 %v64
    %v152 = vunpack.c.l.b16 %v65
    %v153 = vunpack.c.l.b16 %v66
    %v154 = vunpack.c.l.b16 %v67
    %v155 = vunpack.c.l.b16 %v68
    %v156 = vunpack.c.l.b16 %v69
    %v157 = vunpack.c.l.b16 %v70
    %v158 = vunpack.c.l.b16 %v71
    %v159 = vunpack.c.l.b16 %v72
    %v160 = vunpack.c.l.b16 %v73
    %v161 = vunpack.c.l.b16 %v74
    %v162 = vunpack.c.l.b16 %v75
    %v163 = vunpack.c.l.b16 %v76
    %v164 = vpack.c.b16 %v149, %v148
    %v165 = vpack.c.b16 %v151, %v150
    %v166 = vpack.c.b16 %v153, %v152
    %v167 = vpack.c.b16 %v155, %v154
    %v168 = vpack.c.b16 %v157, %v156
    %v169 = vpack.c.b16 %v159, %v158
    %v170 = vpack.c.b16 %v161, %v160
    %v171 = vpack.c.b16 %v163, %v162
    %180 = vmatprep.subr.bf16.mxu0 0
    %181 = vmatpush1.bf16.msra.mxu0 %v164
    %182 = vmatprep.subr.bf16.mxu0 0
    %183 = vmatpush1.bf16.msra.mxu0 %v165
    %184 = vmatprep.subr.bf16.mxu0 0
    %185 = vmatpush1.bf16.msra.mxu0 %v166
    %186 = vmatprep.subr.bf16.mxu0 0
    %187 = vmatpush1.bf16.msra.mxu0 %v167
    %188 = vmatprep.subr.bf16.mxu0 0
    %189 = vmatpush1.bf16.msra.mxu0 %v168
    %190 = vmatprep.subr.bf16.mxu0 0
    %191 = vmatpush1.bf16.msra.mxu0 %v169
    %192 = vmatprep.subr.bf16.mxu0 0
    %193 = vmatpush1.bf16.msra.mxu0 %v170
    %194 = vmatprep.subr.bf16.mxu0 0
    %195 = vmatpush1.bf16.msra.mxu0 %v171
    %196 = vmatprep.subr.bf16.mxu0 0
    %197 = vmatpush1.bf16.msra.mxu0 0
    %198 = vmatprep.subr.bf16.mxu0 0
    %199 = vmatpush1.bf16.msra.mxu0 0
    %200 = vmatprep.subr.bf16.mxu0 0
    %201 = vmatpush1.bf16.msra.mxu0 0
    %202 = vmatprep.subr.bf16.mxu0 0
    %203 = vmatpush1.bf16.msra.mxu0 0
    %204 = vmatprep.subr.bf16.mxu0 0
    %205 = vmatpush1.bf16.msra.mxu0 0
    %206 = vmatprep.subr.bf16.mxu0 0
    %207 = vmatpush1.bf16.msra.mxu0 0
    %208 = vmatprep.subr.bf16.mxu0 0
    %209 = vmatpush1.bf16.msra.mxu0 0
    %210 = vmatprep.subr.bf16.mxu0 0
    %211 = vmatpush1.bf16.msra.mxu0 0
    %212 = vmatprep.mubr.bf16.mxu0 0
    %213 = vmatmul.mubr.bf16.gmra.mrb[0].mxu0 %v116
    %v214 = vpop.f32.mrb[0].mxu0
    %v215 = vadd.f32 %v82, %v214
    %v216 = vpop.f32.mrb[0].mxu0
    %v217 = vpop.f32.mrb[0].mxu0
    %v218 = vadd.f32 %v82, %v217
    %v219 = vpop.f32.mrb[0].mxu0
    %220 = vmatprep.mubr.bf16.mxu0 0
    %221 = vmatmul.mubr.bf16.gmra.mrb[0].mxu0 %v117
    %v222 = vpop.f32.mrb[0].mxu0
    %v223 = vadd.f32 %v82, %v222
    %v224 = vpop.f32.mrb[0].mxu0
    %v225 = vpop.f32.mrb[0].mxu0
    %v226 = vadd.f32 %v82, %v225
    %v227 = vpop.f32.mrb[0].mxu0
    %228 = vmatprep.mubr.bf16.mxu0 0
    %229 = vmatmul.mubr.bf16.gmra.mrb[0].mxu0 %v118
    %v230 = vpop.f32.mrb[0].mxu0
    %v231 = vadd.f32 %v82, %v230
    %v232 = vpop.f32.mrb[0].mxu0
    %v233 = vpop.f32.mrb[0].mxu0
    %v234 = vadd.f32 %v82, %v233
    %v235 = vpop.f32.mrb[0].mxu0
    %236 = vmatprep.mubr.bf16.mxu0 0
    %237 = vmatmul.mubr.bf16.gmra.mrb[0].mxu0 %v119
    %v238 = vpop.f32.mrb[0].mxu0
    %v239 = vadd.f32 %v82, %v238
    %v240 = vpop.f32.mrb[0].mxu0
    %v241 = vpop.f32.mrb[0].mxu0
    %v242 = vadd.f32 %v82, %v241
    %v243 = vpop.f32.mrb[0].mxu0
    %244 = vmatprep.mubr.bf16.mxu0 0
    %245 = vmatmul.mubr.bf16.gmra.mrb[0].mxu0 %v120
    %v246 = vpop.f32.mrb[0].mxu0
    %v247 = vadd.f32 %v82, %v246
    %v248 = vpop.f32.mrb[0].mxu0
    %v249 = vpop.f32.mrb[0].mxu0
    %v250 = vadd.f32 %v82, %v249
    %v251 = vpop.f32.mrb[0].mxu0
    %252 = vmatprep.mubr.bf16.mxu0 0
    %253 = vmatmul.mubr.bf16.gmra.mrb[0].mxu0 %v121
    %v254 = vpop.f32.mrb[0].mxu0
    %v255 = vadd.f32 %v82, %v254
    %v256 = vpop.f32.mrb[0].mxu0
    %v257 = vpop.f32.mrb[0].mxu0
    %v258 = vadd.f32 %v82, %v257
    %v259 = vpop.f32.mrb[0].mxu0
    %260 = vmatprep.mubr.bf16.mxu0 0
    %261 = vmatmul.mubr.bf16.gmra.mrb[0].mxu0 %v122
    %v262 = vpop.f32.mrb[0].mxu0
    %v263 = vadd.f32 %v82, %v262
    %v264 = vpop.f32.mrb[0].mxu0
    %v265 = vpop.f32.mrb[0].mxu0
    %v266 = vadd.f32 %v82, %v265
    %v267 = vpop.f32.mrb[0].mxu0
    %268 = vmatprep.mubr.bf16.mxu0 0
    %269 = vmatmul.mubr.bf16.gmra.mrb[0].mxu0 %v123
    %v270 = vpop.f32.mrb[0].mxu0
    %v271 = vadd.f32 %v82, %v270
    %v272 = vpop.f32.mrb[0].mxu0
    %v273 = vpop.f32.mrb[0].mxu0
    %v274 = vadd.f32 %v82, %v273
    %v275 = vpop.f32.mrb[0].mxu0
    %276 = vdwg.mxu0
    %v277 = vxor.u32 %v215, 2147483648
    %v278 = vxor.u32 %v218, 2147483648
    %v279 = vxor.u32 %v223, 2147483648
    %v280 = vxor.u32 %v226, 2147483648
    %v281 = vxor.u32 %v231, 2147483648
    %v282 = vxor.u32 %v234, 2147483648
    %v283 = vxor.u32 %v239, 2147483648
    %v284 = vxor.u32 %v242, 2147483648
    %v285 = vxor.u32 %v247, 2147483648
    %v286 = vxor.u32 %v250, 2147483648
    %v287 = vxor.u32 %v255, 2147483648
    %v288 = vxor.u32 %v258, 2147483648
    %v289 = vxor.u32 %v263, 2147483648
    %v290 = vxor.u32 %v266, 2147483648
    %v291 = vxor.u32 %v271, 2147483648
    %v292 = vxor.u32 %v274, 2147483648
    %v293 = vmul.f32 %v277, 1.442695
    %v294 = vpow.pop %v293
    %v295 = vmul.f32 %v278, 1.442695
    %v296 = vpow.pop %v295
    %v297 = vmul.f32 %v279, 1.442695
    %v298 = vpow.pop %v297
    %v299 = vmul.f32 %v280, 1.442695
    %v300 = vpow.pop %v299
    %v301 = vmul.f32 %v281, 1.442695
    %v302 = vpow.pop %v301
    %v303 = vmul.f32 %v282, 1.442695
    %v304 = vpow.pop %v303
    %v305 = vmul.f32 %v283, 1.442695
    %v306 = vpow.pop %v305
    %v307 = vmul.f32 %v284, 1.442695
    %v308 = vpow.pop %v307
    %v309 = vmul.f32 %v285, 1.442695
    %v310 = vpow.pop %v309
    %v311 = vmul.f32 %v286, 1.442695
    %v312 = vpow.pop %v311
    %v313 = vmul.f32 %v287, 1.442695
    %v314 = vpow.pop %v313
    %v315 = vmul.f32 %v288, 1.442695
    %v316 = vpow.pop %v315
    %v317 = vmul.f32 %v289, 1.442695
    %v318 = vpow.pop %v317
    %v319 = vmul.f32 %v290, 1.442695
    %v320 = vpow.pop %v319
    %v321 = vmul.f32 %v291, 1.442695
    %v322 = vpow.pop %v321
    %v323 = vmul.f32 %v292, 1.442695
    %v324 = vpow.pop %v323
    %v325 = vadd.f32 %v294, 1.0
    %v326 = vadd.f32 %v296, 1.0
    %v327 = vadd.f32 %v298, 1.0
    %v328 = vadd.f32 %v300, 1.0
    %v329 = vadd.f32 %v302, 1.0
    %v330 = vadd.f32 %v304, 1.0
    %v331 = vadd.f32 %v306, 1.0
    %v332 = vadd.f32 %v308, 1.0
    %v333 = vadd.f32 %v310, 1.0
    %v334 = vadd.f32 %v312, 1.0
    %v335 = vadd.f32 %v314, 1.0
    %v336 = vadd.f32 %v316, 1.0
    %v337 = vadd.f32 %v318, 1.0
    %v338 = vadd.f32 %v320, 1.0
    %v339 = vadd.f32 %v322, 1.0
    %v340 = vadd.f32 %v324, 1.0
    %v341 = vrcp.pop %v325
    %v342 = vmul.f32 1.0, %v341
    %v343 = vrcp.pop %v326
    %v344 = vmul.f32 1.0, %v343
    %v345 = vrcp.pop %v327
    %v346 = vmul.f32 1.0, %v345
    %v347 = vrcp.pop %v328
    %v348 = vmul.f32 1.0, %v347
    %v349 = vrcp.pop %v329
    %v350 = vmul.f32 1.0, %v349
    %v351 = vrcp.pop %v330
    %v352 = vmul.f32 1.0, %v351
    %v353 = vrcp.pop %v331
    %v354 = vmul.f32 1.0, %v353
    %v355 = vrcp.pop %v332
    %v356 = vmul.f32 1.0, %v355
    %v357 = vrcp.pop %v333
    %v358 = vmul.f32 1.0, %v357
    %v359 = vrcp.pop %v334
    %v360 = vmul.f32 1.0, %v359
    %v361 = vrcp.pop %v335
    %v362 = vmul.f32 1.0, %v361
    %v363 = vrcp.pop %v336
    %v364 = vmul.f32 1.0, %v363
    %v365 = vrcp.pop %v337
    %v366 = vmul.f32 1.0, %v365
    %v367 = vrcp.pop %v338
    %v368 = vmul.f32 1.0, %v367
    %v369 = vrcp.pop %v339
    %v370 = vmul.f32 1.0, %v369
    %v371 = vrcp.pop %v340
    %v372 = vmul.f32 1.0, %v371
    %v373 = vmul.f32 %v215, %v342
    %v374 = vmul.f32 %v218, %v344
    %v375 = vmul.f32 %v223, %v346
    %v376 = vmul.f32 %v226, %v348
    %v377 = vmul.f32 %v231, %v350
    %v378 = vmul.f32 %v234, %v352
    %v379 = vmul.f32 %v239, %v354
    %v380 = vmul.f32 %v242, %v356
    %v381 = vmul.f32 %v247, %v358
    %v382 = vmul.f32 %v250, %v360
    %v383 = vmul.f32 %v255, %v362
    %v384 = vmul.f32 %v258, %v364
    %v385 = vmul.f32 %v263, %v366
    %v386 = vmul.f32 %v266, %v368
    %v387 = vmul.f32 %v271, %v370
    %v388 = vmul.f32 %v274, %v372
    %v389 = vpack.c.bf16 %v374, %v373
    %v390 = vpack.c.bf16 %v376, %v375
    %v391 = vpack.c.bf16 %v378, %v377
    %v392 = vpack.c.bf16 %v380, %v379
    %v393 = vpack.c.bf16 %v382, %v381
    %v394 = vpack.c.bf16 %v384, %v383
    %v395 = vpack.c.bf16 %v386, %v385
    %v396 = vpack.c.bf16 %v388, %v387
    %v397 = vld [vmem:[%s8] sm:$0xf]
    %v398 = vld [vmem:[%s8 + $0x4] sm:$0xf]
    %v399 = vld [vmem:[%s8 + $0x8] sm:$0xf]
    %v400 = vld [vmem:[%s8 + $0xc] sm:$0xf]
    %v401 = vld [vmem:[%s9] sm:$0x1]
    %v403 = vlaneseq
    %v404 = vshrl.u32 %v403, 7
    %v405 = vsub.s32 0, %v404
    %v406 = vrot.slane %v401, %v405
    %v412 = vunpack.c.l.b16 %v397
    %v413 = vunpack.c.l.b16 %v398
    %v414 = vunpack.c.l.b16 %v399
    %v415 = vunpack.c.l.b16 %v400
    %v416 = vpack.c.b16 %v413, %v412
    %v417 = vpack.c.b16 %v415, %v414
    %vm420 = vcmask 261120
    %v422 = vsel %vm420, %v389, 0
    %v425 = vsel %vm420, %v390, 0
    %v428 = vsel %vm420, %v391, 0
    %v431 = vsel %vm420, %v392, 0
    %v434 = vsel %vm420, %v393, 0
    %v437 = vsel %vm420, %v394, 0
    %v440 = vsel %vm420, %v395, 0
    %v443 = vsel %vm420, %v396, 0
    %445 = vmatprep.subr.bf16.mxu0 0
    %446 = vmatpush1.bf16.msra.mxu0 %v416
    %447 = vmatprep.subr.bf16.mxu0 0
    %448 = vmatpush1.bf16.msra.mxu0 %v417
    %449 = vmatprep.subr.bf16.mxu0 0
    %450 = vmatpush1.bf16.msra.mxu0 0
    %451 = vmatprep.subr.bf16.mxu0 0
    %452 = vmatpush1.bf16.msra.mxu0 0
    %453 = vmatprep.subr.bf16.mxu0 0
    %454 = vmatpush1.bf16.msra.mxu0 0
    %455 = vmatprep.subr.bf16.mxu0 0
    %456 = vmatpush1.bf16.msra.mxu0 0
    %457 = vmatprep.subr.bf16.mxu0 0
    %458 = vmatpush1.bf16.msra.mxu0 0
    %459 = vmatprep.subr.bf16.mxu0 0
    %460 = vmatpush1.bf16.msra.mxu0 0
    %461 = vmatprep.subr.bf16.mxu0 0
    %462 = vmatpush1.bf16.msra.mxu0 0
    %463 = vmatprep.subr.bf16.mxu0 0
    %464 = vmatpush1.bf16.msra.mxu0 0
    %465 = vmatprep.subr.bf16.mxu0 0
    %466 = vmatpush1.bf16.msra.mxu0 0
    %467 = vmatprep.subr.bf16.mxu0 0
    %468 = vmatpush1.bf16.msra.mxu0 0
    %469 = vmatprep.subr.bf16.mxu0 0
    %470 = vmatpush1.bf16.msra.mxu0 0
    %471 = vmatprep.subr.bf16.mxu0 0
    %472 = vmatpush1.bf16.msra.mxu0 0
    %473 = vmatprep.subr.bf16.mxu0 0
    %474 = vmatpush1.bf16.msra.mxu0 0
    %475 = vmatprep.subr.bf16.mxu0 0
    %476 = vmatpush1.bf16.msra.mxu0 0
    %477 = vmatprep.mubr.bf16.mxu0 0
    %478 = vmatmul.mubr.bf16.gmra.mrb[0].mxu0 %v422
    %v479 = vpop.f32.mrb[0].mxu0
    %v480 = vadd.f32 %v406, %v479
    %v481 = vpop.f32.mrb[0].mxu0
    %v482 = vpop.f32.mrb[0].mxu0
    %v483 = vadd.f32 %v406, %v482
    %v484 = vpop.f32.mrb[0].mxu0
    %485 = vmatprep.mubr.bf16.mxu0 0
    %486 = vmatmul.mubr.bf16.gmra.mrb[0].mxu0 %v425
    %v487 = vpop.f32.mrb[0].mxu0
    %v488 = vadd.f32 %v406, %v487
    %v489 = vpop.f32.mrb[0].mxu0
    %v490 = vpop.f32.mrb[0].mxu0
    %v491 = vadd.f32 %v406, %v490
    %v492 = vpop.f32.mrb[0].mxu0
    %493 = vmatprep.mubr.bf16.mxu0 0
    %494 = vmatmul.mubr.bf16.gmra.mrb[0].mxu0 %v428
    %v495 = vpop.f32.mrb[0].mxu0
    %v496 = vadd.f32 %v406, %v495
    %v497 = vpop.f32.mrb[0].mxu0
    %v498 = vpop.f32.mrb[0].mxu0
    %v499 = vadd.f32 %v406, %v498
    %v500 = vpop.f32.mrb[0].mxu0
    %501 = vmatprep.mubr.bf16.mxu0 0
    %502 = vmatmul.mubr.bf16.gmra.mrb[0].mxu0 %v431
    %v503 = vpop.f32.mrb[0].mxu0
    %v504 = vadd.f32 %v406, %v503
    %v505 = vpop.f32.mrb[0].mxu0
    %v506 = vpop.f32.mrb[0].mxu0
    %v507 = vadd.f32 %v406, %v506
    %v508 = vpop.f32.mrb[0].mxu0
    %509 = vmatprep.mubr.bf16.mxu0 0
    %510 = vmatmul.mubr.bf16.gmra.mrb[0].mxu0 %v434
    %v511 = vpop.f32.mrb[0].mxu0
    %v512 = vadd.f32 %v406, %v511
    %v513 = vpop.f32.mrb[0].mxu0
    %v514 = vpop.f32.mrb[0].mxu0
    %v515 = vadd.f32 %v406, %v514
    %v516 = vpop.f32.mrb[0].mxu0
    %517 = vmatprep.mubr.bf16.mxu0 0
    %518 = vmatmul.mubr.bf16.gmra.mrb[0].mxu0 %v437
    %v519 = vpop.f32.mrb[0].mxu0
    %v520 = vadd.f32 %v406, %v519
    %v521 = vpop.f32.mrb[0].mxu0
    %v522 = vpop.f32.mrb[0].mxu0
    %v523 = vadd.f32 %v406, %v522
    %v524 = vpop.f32.mrb[0].mxu0
    %525 = vmatprep.mubr.bf16.mxu0 0
    %526 = vmatmul.mubr.bf16.gmra.mrb[0].mxu0 %v440
    %v527 = vpop.f32.mrb[0].mxu0
    %v528 = vadd.f32 %v406, %v527
    %v529 = vpop.f32.mrb[0].mxu0
    %v530 = vpop.f32.mrb[0].mxu0
    %v531 = vadd.f32 %v406, %v530
    %v532 = vpop.f32.mrb[0].mxu0
    %533 = vmatprep.mubr.bf16.mxu0 0
    %534 = vmatmul.mubr.bf16.gmra.mrb[0].mxu0 %v443
    %v535 = vpop.f32.mrb[0].mxu0
    %v536 = vadd.f32 %v406, %v535
    %v537 = vpop.f32.mrb[0].mxu0
    %v538 = vpop.f32.mrb[0].mxu0
    %v539 = vadd.f32 %v406, %v538
    %v540 = vpop.f32.mrb[0].mxu0
    %541 = vdwg.mxu0
    %v542 = vxor.u32 %v480, 2147483648
    %v543 = vxor.u32 %v483, 2147483648
    %v544 = vxor.u32 %v488, 2147483648
    %v545 = vxor.u32 %v491, 2147483648
    %v546 = vxor.u32 %v496, 2147483648
    %v547 = vxor.u32 %v499, 2147483648
    %v548 = vxor.u32 %v504, 2147483648
    %v549 = vxor.u32 %v507, 2147483648
    %v550 = vxor.u32 %v512, 2147483648
    %v551 = vxor.u32 %v515, 2147483648
    %v552 = vxor.u32 %v520, 2147483648
    %v553 = vxor.u32 %v523, 2147483648
    %v554 = vxor.u32 %v528, 2147483648
    %v555 = vxor.u32 %v531, 2147483648
    %v556 = vxor.u32 %v536, 2147483648
    %v557 = vxor.u32 %v539, 2147483648
    %v558 = vmul.f32 %v542, 1.442695
    %v559 = vpow.pop %v558
    %v560 = vmul.f32 %v543, 1.442695
    %v561 = vpow.pop %v560
    %v562 = vmul.f32 %v544, 1.442695
    %v563 = vpow.pop %v562
    %v564 = vmul.f32 %v545, 1.442695
    %v565 = vpow.pop %v564
    %v566 = vmul.f32 %v546, 1.442695
    %v567 = vpow.pop %v566
    %v568 = vmul.f32 %v547, 1.442695
    %v569 = vpow.pop %v568
    %v570 = vmul.f32 %v548, 1.442695
    %v571 = vpow.pop %v570
    %v572 = vmul.f32 %v549, 1.442695
    %v573 = vpow.pop %v572
    %v574 = vmul.f32 %v550, 1.442695
    %v575 = vpow.pop %v574
    %v576 = vmul.f32 %v551, 1.442695
    %v577 = vpow.pop %v576
    %v578 = vmul.f32 %v552, 1.442695
    %v579 = vpow.pop %v578
    %v580 = vmul.f32 %v553, 1.442695
    %v581 = vpow.pop %v580
    %v582 = vmul.f32 %v554, 1.442695
    %v583 = vpow.pop %v582
    %v584 = vmul.f32 %v555, 1.442695
    %v585 = vpow.pop %v584
    %v586 = vmul.f32 %v556, 1.442695
    %v587 = vpow.pop %v586
    %v588 = vmul.f32 %v557, 1.442695
    %v589 = vpow.pop %v588
    %v590 = vadd.f32 %v559, 1.0
    %v591 = vadd.f32 %v561, 1.0
    %v592 = vadd.f32 %v563, 1.0
    %v593 = vadd.f32 %v565, 1.0
    %v594 = vadd.f32 %v567, 1.0
    %v595 = vadd.f32 %v569, 1.0
    %v596 = vadd.f32 %v571, 1.0
    %v597 = vadd.f32 %v573, 1.0
    %v598 = vadd.f32 %v575, 1.0
    %v599 = vadd.f32 %v577, 1.0
    %v600 = vadd.f32 %v579, 1.0
    %v601 = vadd.f32 %v581, 1.0
    %v602 = vadd.f32 %v583, 1.0
    %v603 = vadd.f32 %v585, 1.0
    %v604 = vadd.f32 %v587, 1.0
    %v605 = vadd.f32 %v589, 1.0
    %v606 = vrcp.pop %v590
    %v607 = vmul.f32 1.0, %v606
    %v608 = vrcp.pop %v591
    %v609 = vmul.f32 1.0, %v608
    %v610 = vrcp.pop %v592
    %v611 = vmul.f32 1.0, %v610
    %v612 = vrcp.pop %v593
    %v613 = vmul.f32 1.0, %v612
    %v614 = vrcp.pop %v594
    %v615 = vmul.f32 1.0, %v614
    %v616 = vrcp.pop %v595
    %v617 = vmul.f32 1.0, %v616
    %v618 = vrcp.pop %v596
    %v619 = vmul.f32 1.0, %v618
    %v620 = vrcp.pop %v597
    %v621 = vmul.f32 1.0, %v620
    %v622 = vrcp.pop %v598
    %v623 = vmul.f32 1.0, %v622
    %v624 = vrcp.pop %v599
    %v625 = vmul.f32 1.0, %v624
    %v626 = vrcp.pop %v600
    %v627 = vmul.f32 1.0, %v626
    %v628 = vrcp.pop %v601
    %v629 = vmul.f32 1.0, %v628
    %v630 = vrcp.pop %v602
    %v631 = vmul.f32 1.0, %v630
    %v632 = vrcp.pop %v603
    %v633 = vmul.f32 1.0, %v632
    %v634 = vrcp.pop %v604
    %v635 = vmul.f32 1.0, %v634
    %v636 = vrcp.pop %v605
    %v637 = vmul.f32 1.0, %v636
    %v638 = vmul.f32 %v480, %v607
    %v639 = vmul.f32 %v483, %v609
    %v640 = vmul.f32 %v488, %v611
    %v641 = vmul.f32 %v491, %v613
    %v642 = vmul.f32 %v496, %v615
    %v643 = vmul.f32 %v499, %v617
    %v644 = vmul.f32 %v504, %v619
    %v645 = vmul.f32 %v507, %v621
    %v646 = vmul.f32 %v512, %v623
    %v647 = vmul.f32 %v515, %v625
    %v648 = vmul.f32 %v520, %v627
    %v649 = vmul.f32 %v523, %v629
    %v650 = vmul.f32 %v528, %v631
    %v651 = vmul.f32 %v531, %v633
    %v652 = vmul.f32 %v536, %v635
    %v653 = vmul.f32 %v539, %v637
    %v654 = vld [vmem:[%s10] sm:$0x1]
    %v656 = vlaneseq
    %v657 = vshrl.u32 %v656, 7
    %v658 = vsub.s32 0, %v657
    %v659 = vrot.slane %v654, %v658
    %v661 = vmul.f32 %v638, %v659
    %v662 = vmul.f32 %v639, %v659
    %v663 = vmul.f32 %v640, %v659
    %v664 = vmul.f32 %v641, %v659
    %v665 = vmul.f32 %v642, %v659
    %v666 = vmul.f32 %v643, %v659
    %v667 = vmul.f32 %v644, %v659
    %v668 = vmul.f32 %v645, %v659
    %v669 = vmul.f32 %v646, %v659
    %v670 = vmul.f32 %v647, %v659
    %v671 = vmul.f32 %v648, %v659
    %v672 = vmul.f32 %v649, %v659
    %v673 = vmul.f32 %v650, %v659
    %v674 = vmul.f32 %v651, %v659
    %v675 = vmul.f32 %v652, %v659
    %v676 = vmul.f32 %v653, %v659
    %v677 = vsel %vm420, %v661, 0.0
    %678 = vadd.xlane.f32.xlu0 %v677
    %v679 = vpop.xlane.xlu0 %678
    %v680 = vsel %vm420, %v662, 0.0
    %681 = vadd.xlane.f32.xlu0 %v680
    %v682 = vpop.xlane.xlu0 %681
    %v683 = vsel %vm420, %v663, 0.0
    %684 = vadd.xlane.f32.xlu0 %v683
    %v685 = vpop.xlane.xlu0 %684
    %v686 = vsel %vm420, %v664, 0.0
    %687 = vadd.xlane.f32.xlu0 %v686
    %v688 = vpop.xlane.xlu0 %687
    %v689 = vsel %vm420, %v665, 0.0
    %690 = vadd.xlane.f32.xlu0 %v689
    %v691 = vpop.xlane.xlu0 %690
    %v692 = vsel %vm420, %v666, 0.0
    %693 = vadd.xlane.f32.xlu0 %v692
    %v694 = vpop.xlane.xlu0 %693
    %v695 = vsel %vm420, %v667, 0.0
    %696 = vadd.xlane.f32.xlu0 %v695
    %v697 = vpop.xlane.xlu0 %696
    %v698 = vsel %vm420, %v668, 0.0
    %699 = vadd.xlane.f32.xlu0 %v698
    %v700 = vpop.xlane.xlu0 %699
    %v701 = vsel %vm420, %v669, 0.0
    %702 = vadd.xlane.f32.xlu0 %v701
    %v703 = vpop.xlane.xlu0 %702
    %v704 = vsel %vm420, %v670, 0.0
    %705 = vadd.xlane.f32.xlu0 %v704
    %v706 = vpop.xlane.xlu0 %705
    %v707 = vsel %vm420, %v671, 0.0
    %708 = vadd.xlane.f32.xlu0 %v707
    %v709 = vpop.xlane.xlu0 %708
    %v710 = vsel %vm420, %v672, 0.0
    %711 = vadd.xlane.f32.xlu0 %v710
    %v712 = vpop.xlane.xlu0 %711
    %v713 = vsel %vm420, %v673, 0.0
    %714 = vadd.xlane.f32.xlu0 %v713
    %v715 = vpop.xlane.xlu0 %714
    %v716 = vsel %vm420, %v674, 0.0
    %717 = vadd.xlane.f32.xlu0 %v716
    %v718 = vpop.xlane.xlu0 %717
    %v719 = vsel %vm420, %v675, 0.0
    %720 = vadd.xlane.f32.xlu0 %v719
    %v721 = vpop.xlane.xlu0 %720
    %v722 = vsel %vm420, %v676, 0.0
    %723 = vadd.xlane.f32.xlu0 %v722
    %v724 = vpop.xlane.xlu0 %723
    %v725 = vld [vmem:[%s2] sm:$0xff]
    %v726 = vld [vmem:[%s2 + $0x8] sm:$0xff]
    %v727 = vld [vmem:[%s2 + $0x10] sm:$0xff]
    %v728 = vld [vmem:[%s2 + $0x18] sm:$0xff]
    %v729 = vld [vmem:[%s2 + $0x20] sm:$0xff]
    %v730 = vld [vmem:[%s2 + $0x28] sm:$0xff]
    %v731 = vld [vmem:[%s2 + $0x30] sm:$0xff]
    %v732 = vld [vmem:[%s2 + $0x38] sm:$0xff]
    %v733 = vld [vmem:[%s2 + $0x40] sm:$0xff]
    %v734 = vld [vmem:[%s2 + $0x48] sm:$0xff]
    %v735 = vld [vmem:[%s2 + $0x50] sm:$0xff]
    %v736 = vld [vmem:[%s2 + $0x58] sm:$0xff]
    %v737 = vld [vmem:[%s2 + $0x60] sm:$0xff]
    %v738 = vld [vmem:[%s2 + $0x68] sm:$0xff]
    %v739 = vld [vmem:[%s2 + $0x70] sm:$0xff]
    %v740 = vld [vmem:[%s2 + $0x78] sm:$0xff]
    %v741 = vmul.f32 %v679, %v725
    %v742 = vmul.f32 %v682, %v726
    %v743 = vmul.f32 %v685, %v727
    %v744 = vmul.f32 %v688, %v728
    %v745 = vmul.f32 %v691, %v729
    %v746 = vmul.f32 %v694, %v730
    %v747 = vmul.f32 %v697, %v731
    %v748 = vmul.f32 %v700, %v732
    %v749 = vmul.f32 %v703, %v733
    %v750 = vmul.f32 %v706, %v734
    %v751 = vmul.f32 %v709, %v735
    %v752 = vmul.f32 %v712, %v736
    %v753 = vmul.f32 %v715, %v737
    %v754 = vmul.f32 %v718, %v738
    %v755 = vmul.f32 %v721, %v739
    %v756 = vmul.f32 %v724, %v740
    %v757 = vlaneseq
    %v758 = vand.u32 %v757, 127
    %v759 = vld [vmem:[%s3] sm:$0xff]
    %v760 = vld [vmem:[%s3 + $0x8] sm:$0xff]
    %v761 = vld [vmem:[%s3 + $0x10] sm:$0xff]
    %v762 = vld [vmem:[%s3 + $0x18] sm:$0xff]
    %v763 = vld [vmem:[%s3 + $0x20] sm:$0xff]
    %v764 = vld [vmem:[%s3 + $0x28] sm:$0xff]
    %v765 = vld [vmem:[%s3 + $0x30] sm:$0xff]
    %v766 = vld [vmem:[%s3 + $0x38] sm:$0xff]
    %v767 = vld [vmem:[%s3 + $0x40] sm:$0xff]
    %v768 = vld [vmem:[%s3 + $0x48] sm:$0xff]
    %v769 = vld [vmem:[%s3 + $0x50] sm:$0xff]
    %v770 = vld [vmem:[%s3 + $0x58] sm:$0xff]
    %v771 = vld [vmem:[%s3 + $0x60] sm:$0xff]
    %v772 = vld [vmem:[%s3 + $0x68] sm:$0xff]
    %v773 = vld [vmem:[%s3 + $0x70] sm:$0xff]
    %v774 = vld [vmem:[%s3 + $0x78] sm:$0xff]
    %775 = vset.pattern.permute.xlu0 0
    %776 = vperm.xlu0 %775, %v759
    %v777 = vpop.permute.xlu0 %776
    %778 = vset.pattern.permute.xlu0 0
    %779 = vperm.xlu0 %778, %v760
    %v780 = vpop.permute.xlu0 %779
    %781 = vset.pattern.permute.xlu0 0
    %782 = vperm.xlu0 %781, %v761
    %v783 = vpop.permute.xlu0 %782
    %784 = vset.pattern.permute.xlu0 0
    %785 = vperm.xlu0 %784, %v762
    %v786 = vpop.permute.xlu0 %785
    %787 = vset.pattern.permute.xlu0 0
    %788 = vperm.xlu0 %787, %v763
    %v789 = vpop.permute.xlu0 %788
    %790 = vset.pattern.permute.xlu0 0
    %791 = vperm.xlu0 %790, %v764
    %v792 = vpop.permute.xlu0 %791
    %793 = vset.pattern.permute.xlu0 0
    %794 = vperm.xlu0 %793, %v765
    %v795 = vpop.permute.xlu0 %794
    %796 = vset.pattern.permute.xlu0 0
    %797 = vperm.xlu0 %796, %v766
    %v798 = vpop.permute.xlu0 %797
    %799 = vset.pattern.permute.xlu0 0
    %800 = vperm.xlu0 %799, %v767
    %v801 = vpop.permute.xlu0 %800
    %802 = vset.pattern.permute.xlu0 0
    %803 = vperm.xlu0 %802, %v768
    %v804 = vpop.permute.xlu0 %803
    %805 = vset.pattern.permute.xlu0 0
    %806 = vperm.xlu0 %805, %v769
    %v807 = vpop.permute.xlu0 %806
    %808 = vset.pattern.permute.xlu0 0
    %809 = vperm.xlu0 %808, %v770
    %v810 = vpop.permute.xlu0 %809
    %811 = vset.pattern.permute.xlu0 0
    %812 = vperm.xlu0 %811, %v771
    %v813 = vpop.permute.xlu0 %812
    %814 = vset.pattern.permute.xlu0 0
    %815 = vperm.xlu0 %814, %v772
    %v816 = vpop.permute.xlu0 %815
    %817 = vset.pattern.permute.xlu0 0
    %818 = vperm.xlu0 %817, %v773
    %v819 = vpop.permute.xlu0 %818
    %820 = vset.pattern.permute.xlu0 0
    %821 = vperm.xlu0 %820, %v774
    %v822 = vpop.permute.xlu0 %821
    %vm823 = vcmp.eq.s32.totalorder %v758, %v777
    %vm824 = vcmp.eq.s32.totalorder %v758, %v780
    %vm825 = vcmp.eq.s32.totalorder %v758, %v783
    %vm826 = vcmp.eq.s32.totalorder %v758, %v786
    %vm827 = vcmp.eq.s32.totalorder %v758, %v789
    %vm828 = vcmp.eq.s32.totalorder %v758, %v792
    %vm829 = vcmp.eq.s32.totalorder %v758, %v795
    %vm830 = vcmp.eq.s32.totalorder %v758, %v798
    %vm831 = vcmp.eq.s32.totalorder %v758, %v801
    %vm832 = vcmp.eq.s32.totalorder %v758, %v804
    %vm833 = vcmp.eq.s32.totalorder %v758, %v807
    %vm834 = vcmp.eq.s32.totalorder %v758, %v810
    %vm835 = vcmp.eq.s32.totalorder %v758, %v813
    %vm836 = vcmp.eq.s32.totalorder %v758, %v816
    %vm837 = vcmp.eq.s32.totalorder %v758, %v819
    %vm838 = vcmp.eq.s32.totalorder %v758, %v822
    %v839 = vsel %vm823, 1, 0
    %v840 = vsel %vm824, 1, 0
    %v841 = vsel %vm825, 1, 0
    %v842 = vsel %vm826, 1, 0
    %v843 = vsel %vm827, 1, 0
    %v844 = vsel %vm828, 1, 0
    %v845 = vsel %vm829, 1, 0
    %v846 = vsel %vm830, 1, 0
    %v847 = vsel %vm831, 1, 0
    %v848 = vsel %vm832, 1, 0
    %v849 = vsel %vm833, 1, 0
    %v850 = vsel %vm834, 1, 0
    %v851 = vsel %vm835, 1, 0
    %v852 = vsel %vm836, 1, 0
    %v853 = vsel %vm837, 1, 0
    %v854 = vsel %vm838, 1, 0
    %v855 = vcvt.s32.f32 %v839
    %v856 = vcvt.s32.f32 %v840
    %v857 = vcvt.s32.f32 %v841
    %v858 = vcvt.s32.f32 %v842
    %v859 = vcvt.s32.f32 %v843
    %v860 = vcvt.s32.f32 %v844
    %v861 = vcvt.s32.f32 %v845
    %v862 = vcvt.s32.f32 %v846
    %v863 = vcvt.s32.f32 %v847
    %v864 = vcvt.s32.f32 %v848
    %v865 = vcvt.s32.f32 %v849
    %v866 = vcvt.s32.f32 %v850
    %v867 = vcvt.s32.f32 %v851
    %v868 = vcvt.s32.f32 %v852
    %v869 = vcvt.s32.f32 %v853
    %v870 = vcvt.s32.f32 %v854
    %872 = vset.pattern.permute.xlu0 0
    %873 = vperm.xlu0 %872, %v741
    %v874 = vpop.permute.xlu0 %873
    %877 = vset.pattern.permute.xlu0 0
    %878 = vperm.xlu0 %877, %v742
    %v879 = vpop.permute.xlu0 %878
    %882 = vset.pattern.permute.xlu0 0
    %883 = vperm.xlu0 %882, %v743
    %v884 = vpop.permute.xlu0 %883
    %887 = vset.pattern.permute.xlu0 0
    %888 = vperm.xlu0 %887, %v744
    %v889 = vpop.permute.xlu0 %888
    %892 = vset.pattern.permute.xlu0 0
    %893 = vperm.xlu0 %892, %v745
    %v894 = vpop.permute.xlu0 %893
    %897 = vset.pattern.permute.xlu0 0
    %898 = vperm.xlu0 %897, %v746
    %v899 = vpop.permute.xlu0 %898
    %902 = vset.pattern.permute.xlu0 0
    %903 = vperm.xlu0 %902, %v747
    %v904 = vpop.permute.xlu0 %903
    %907 = vset.pattern.permute.xlu0 0
    %908 = vperm.xlu0 %907, %v748
    %v909 = vpop.permute.xlu0 %908
    %912 = vset.pattern.permute.xlu0 0
    %913 = vperm.xlu0 %912, %v749
    %v914 = vpop.permute.xlu0 %913
    %917 = vset.pattern.permute.xlu0 0
    %918 = vperm.xlu0 %917, %v750
    %v919 = vpop.permute.xlu0 %918
    %922 = vset.pattern.permute.xlu0 0
    %923 = vperm.xlu0 %922, %v751
    %v924 = vpop.permute.xlu0 %923
    %927 = vset.pattern.permute.xlu0 0
    %928 = vperm.xlu0 %927, %v752
    %v929 = vpop.permute.xlu0 %928
    %932 = vset.pattern.permute.xlu0 0
    %933 = vperm.xlu0 %932, %v753
    %v934 = vpop.permute.xlu0 %933
    %937 = vset.pattern.permute.xlu0 0
    %938 = vperm.xlu0 %937, %v754
    %v939 = vpop.permute.xlu0 %938
    %942 = vset.pattern.permute.xlu0 0
    %943 = vperm.xlu0 %942, %v755
    %v944 = vpop.permute.xlu0 %943
    %947 = vset.pattern.permute.xlu0 0
    %948 = vperm.xlu0 %947, %v756
    %v949 = vpop.permute.xlu0 %948
    %v951 = vmul.f32 %v855, %v874
    %v952 = vmul.f32 %v856, %v879
    %v953 = vmul.f32 %v857, %v884
    %v954 = vmul.f32 %v858, %v889
    %v955 = vmul.f32 %v859, %v894
    %v956 = vmul.f32 %v860, %v899
    %v957 = vmul.f32 %v861, %v904
    %v958 = vmul.f32 %v862, %v909
    %v959 = vmul.f32 %v863, %v914
    %v960 = vmul.f32 %v864, %v919
    %v961 = vmul.f32 %v865, %v924
    %v962 = vmul.f32 %v866, %v929
    %v963 = vmul.f32 %v867, %v934
    %v964 = vmul.f32 %v868, %v939
    %v965 = vmul.f32 %v869, %v944
    %v966 = vmul.f32 %v870, %v949
    %v967 = vld [vmem:[#allocation3] sm:$0xff]
    %v968 = vld [vmem:[%s1] sm:$0xff]
    %969 = vmatprep.subr.mxu0 0.0
    %970 = vmatpush1.msra.mxu0 %v951
    %971 = vmatprep.subr.mxu0 0.0
    %972 = vmatpush1.msra.mxu0 %v952
    %973 = vmatprep.subr.mxu0 0.0
    %974 = vmatpush1.msra.mxu0 %v953
    %975 = vmatprep.subr.mxu0 0.0
    %976 = vmatpush1.msra.mxu0 %v954
    %977 = vmatprep.subr.mxu0 0.0
    %978 = vmatpush1.msra.mxu0 %v955
    %979 = vmatprep.subr.mxu0 0.0
    %980 = vmatpush1.msra.mxu0 %v956
    %981 = vmatprep.subr.mxu0 0.0
    %982 = vmatpush1.msra.mxu0 %v957
    %983 = vmatprep.subr.mxu0 0.0
    %984 = vmatpush1.msra.mxu0 %v958
    %985 = vmatprep.subr.mxu0 0.0
    %986 = vmatpush1.msra.mxu0 %v959
    %987 = vmatprep.subr.mxu0 0.0
    %988 = vmatpush1.msra.mxu0 %v960
    %989 = vmatprep.subr.mxu0 0.0
    %990 = vmatpush1.msra.mxu0 %v961
    %991 = vmatprep.subr.mxu0 0.0
    %992 = vmatpush1.msra.mxu0 %v962
    %993 = vmatprep.subr.mxu0 0.0
    %994 = vmatpush1.msra.mxu0 %v963
    %995 = vmatprep.subr.mxu0 0.0
    %996 = vmatpush1.msra.mxu0 %v964
    %997 = vmatprep.subr.mxu0 0.0
    %998 = vmatpush1.msra.mxu0 %v965
    %999 = vmatprep.subr.mxu0 0.0
    %1000 = vmatpush1.msra.mxu0 %v966
    %1001 = vmatprep.subr.mxu0 0.0
    %1002 = vmatpush1.msra.mxu0 0.0
    %1003 = vmatprep.subr.mxu0 0.0
    %1004 = vmatpush1.msra.mxu0 0.0
    %1005 = vmatprep.subr.mxu0 0.0
    %1006 = vmatpush1.msra.mxu0 0.0
    %1007 = vmatprep.subr.mxu0 0.0
    %1008 = vmatpush1.msra.mxu0 0.0
    %1009 = vmatprep.subr.mxu0 0.0
    %1010 = vmatpush1.msra.mxu0 0.0
    %1011 = vmatprep.subr.mxu0 0.0
    %1012 = vmatpush1.msra.mxu0 0.0
    %1013 = vmatprep.subr.mxu0 0.0
    %1014 = vmatpush1.msra.mxu0 0.0
    %1015 = vmatprep.subr.mxu0 0.0
    %1016 = vmatpush1.msra.mxu0 0.0
    %1017 = vmatprep.subr.mxu0 0.0
    %1018 = vmatpush1.msra.mxu0 0.0
    %1019 = vmatprep.subr.mxu0 0.0
    %1020 = vmatpush1.msra.mxu0 0.0
    %1021 = vmatprep.subr.mxu0 0.0
    %1022 = vmatpush1.msra.mxu0 0.0
    %1023 = vmatprep.subr.mxu0 0.0
    %1024 = vmatpush1.msra.mxu0 0.0
    %1025 = vmatprep.subr.mxu0 0.0
    %1026 = vmatpush1.msra.mxu0 0.0
    %1027 = vmatprep.subr.mxu0 0.0
    %1028 = vmatpush1.msra.mxu0 0.0
    %1029 = vmatprep.subr.mxu0 0.0
    %1030 = vmatpush1.msra.mxu0 0.0
    %1031 = vmatprep.subr.mxu0 0.0
    %1032 = vmatpush1.msra.mxu0 0.0
    %1033 = vmatprep.mubr.f32.mxu0 0.0
    %1034 = vmatmul.mubr.f32.gmra.mrb[0].mxu0 %v968
    %v1035 = vpop.f32.mrb[0].mxu0
    %v1036 = vadd.f32 0.0, %v1035
    %v1037 = vpop.f32.mrb[0].mxu0
    %1038 = vdwg.mxu0
    %v1039 = vadd.f32 %v967, %v1036
    %1040 = vst [vmem:[#allocation3] sm:$0xff] %v1039
    // Predicated region
    $region50: #{tpu_custom_call.1} parent=1 // pred_check
      %p1041 = pneg %p40
    $region51: #{tpu_custom_call.1} parent=1 // pred_check_branch
      %1043 = sbr.rel (%p1041) target = $region53
    $region52: #{tpu_custom_call.1} parent=1 // pred_region
      %v1044 = vld [vmem:[#allocation3] sm:$0xff]
      %v1045 = vmul.f32 %v1044, 0.01
      %v1046 = vld [vmem:[%s4] sm:$0xff]
      %v1047 = vadd.f32 %v1046, %v1045
      %v1048 = vld [vmem:[%s5] sm:$0x1]
      %v1050 = vlaneseq
      %v1051 = vshrl.u32 %v1050, 7
      %v1052 = vsub.s32 0, %v1051
      %v1053 = vrot.slane %v1048, %v1052
      %v1055 = vmul.f32 %v1047, %v1053
      %1056 = vst [vmem:[#allocation3] sm:$0xff] %v1055
    $region53: #{tpu_custom_call.1} parent=1 // pred_fallthru
      _
    // Predicated region
    $region54: #{tpu_custom_call.1} parent=1 // pred_check
      _
    $region55: #{tpu_custom_call.1} parent=1 // pred_check_branch
      %1058 = sbr.rel (0) target = $region57
    $region56: #{tpu_custom_call.1} parent=1 // pred_region
      %s1060 = ssub.s32 128, 128
      %1061 = vsyncadd [#allocation4], %s1060
      %s1063 = sshll.u32 [#allocation3], 4
      %s1064 = int_to_ptr.vmem [resolvable:$true] %s1063
      %1066 = dma.vmem_to_hbm [thread:$0]  %s1064, 128, %s11, [#allocation4]
    $region57: #{tpu_custom_call.1} parent=1 // pred_fallthru
      _
    // Predicated region
    $region58: #{tpu_custom_call.1} parent=1 // pred_check
      _
    $region59: #{tpu_custom_call.1} parent=1 // pred_check_branch
      %1068 = sbr.rel (0) target = $region61
    $region60: #{tpu_custom_call.1} parent=1 // pred_region
      %1069 = dma.done [#allocation4], 128
    $region61: #{tpu_custom_call.1} parent=1 // pred_fallthru
      _
    %1070 = vsyncpa [#allocation4], 1

</llo_original>
